<compile_context>
chip_gen: v7x
topology: tpu7x:2x2x1
jax: 0.10.0
libtpu: 0.0.40
codegen_flags: <defaults>
</compile_context>

<pallas_src>
import jax
import jax.numpy as jnp
from jax.experimental import pallas as pl
from jax.experimental.pallas import tpu as pltpu

EPS = 1e-6


def _vmem_budget_bytes():
    """Generation-aware budget for the streamed tiles + f32 intermediates."""
    try:
        cap = pltpu.get_tpu_info().vmem_capacity_bytes
    except Exception:  # off-TPU tracing / older runtimes
        cap = 128 * 1024 * 1024
    if cap <= 64 * 1024 * 1024:          # v7x: 64 MiB per TensorCore
        return 20 * 1024 * 1024
    return 32 * 1024 * 1024              # v5e / v6e: 128 MiB per TensorCore


def _choose_tile_rows(rows, features, itemsize, vmem_budget):
    """Largest row tile whose full footprint (streams + f32 temps) fits."""
    # Per row: 3 streams (x, out, y) x 2 pipeline buffers x itemsize, plus
    # ~3 f32 intermediates (upcast out, diff, normed) at (tile_r, F).
    per_row = (6 * itemsize + 12) * features
    cap = max(8, vmem_budget // per_row)
    # Target ~4 MiB per streamed buffer: at v7x's ~3.2 TB/s this keeps the
    # fixed ~0.35us/step pipeline overhead to a few percent of step time.
    target = max(8, (4 * 1024 * 1024) // (features * itemsize))
    tile = min(int(cap), int(target))
    tile = max(8, (tile // 8) * 8)       # sublane-aligned
    if rows <= tile:
        return rows                       # full extent — always a legal block
    return tile


def _make_kernel(f_real, f_pad):
    need_mask = (f_pad != f_real)

    def kernel(x_ref, out_ref, a_ref, b_ref, o_ref):
        # f32 statistics; padded lanes of `out` are zero by construction.
        out = out_ref[...].astype(jnp.float32)      # (R, F_pad)
        a = a_ref[...].astype(jnp.float32)          # (1, F_pad) — resident
        b = b_ref[...].astype(jnp.float32)          # (1, F_pad)

        # mean over the REAL feature count (zero pads don't change the sum).
        mean = jnp.sum(out, axis=-1, keepdims=True) * (1.0 / f_real)   # (R, 1)
        diff = out - mean
        if need_mask:
            # Zero padded lanes so they don't pollute the variance sum.
            lane = jax.lax.broadcasted_iota(jnp.int32, (1, f_pad), 1)
            diff = jnp.where(lane < f_real, diff, 0.0)
        # torch.std default: unbiased (divide by N-1); centered two-pass form
        # kept for accuracy — the reduces ride the XLU slot and are free
        # under the DMA shadow.
        var = jnp.sum(diff * diff, axis=-1, keepdims=True) * (1.0 / (f_real - 1))
        std = jnp.sqrt(var)
        inv = pl.reciprocal(std + EPS)               # (R, 1) per-row reciprocal
        normed = (a * diff) * inv + b                # (R, F_pad) f32
        # Residual add in f32, single rounding to the output dtype.
        o_ref[...] = (x_ref[...].astype(jnp.float32) + normed).astype(o_ref.dtype)

    return kernel


def res_connect(x, out, a_2, b_2):
    """x, out: (B, S, F); a_2, b_2: (F,). Returns x + layernorm(out)."""
    B, S, F = x.shape
    assert F > 1, "layernorm needs features > 1 (unbiased std divides by N-1)"
    rows = B * S

    x2 = x.reshape(rows, F)
    out2 = out.reshape(rows, F)
    a2 = a_2.reshape(1, F)
    b2 = b_2.reshape(1, F)

    # Lane density: pad F to a multiple of 128 so the output store path is
    # full-width vst (masked partial stores are the biggest measured penalty).
    f_pad = ((F + 127) // 128) * 128
    if f_pad != F:
        pad = ((0, 0), (0, f_pad - F))
        x2 = jnp.pad(x2, pad)
        out2 = jnp.pad(out2, pad)        # zero pads -> sums over F unchanged
        a2 = jnp.pad(a2, pad)
        b2 = jnp.pad(b2, pad)

    itemsize = jnp.dtype(x.dtype).itemsize
    vmem_budget = _vmem_budget_bytes()
    tile_r = _choose_tile_rows(rows, f_pad, itemsize, vmem_budget)
    grid = (pl.cdiv(rows, tile_r),)

    # Explicit scoped-VMEM limit covering double-buffered streams, the f32
    # intermediates, resident params, and compiler scratch headroom.
    tile_bytes = tile_r * f_pad * itemsize
    f32_bytes = 12 * tile_r * f_pad
    vmem_limit = 6 * tile_bytes + f32_bytes + 4 * f_pad * 4 + (2 << 20)
    vmem_limit = int(max(16 << 20, vmem_limit))

    kernel = _make_kernel(F, f_pad)

    y = pl.pallas_call(
        kernel,
        out_shape=jax.ShapeDtypeStruct((rows, f_pad), x.dtype),
        grid=grid,
        in_specs=[
            pl.BlockSpec((tile_r, f_pad), lambda i: (i, 0)),   # x   (streamed)
            pl.BlockSpec((tile_r, f_pad), lambda i: (i, 0)),   # out (streamed)
            pl.BlockSpec((1, f_pad), lambda i: (0, 0)),        # a_2 (resident)
            pl.BlockSpec((1, f_pad), lambda i: (0, 0)),        # b_2 (resident)
        ],
        out_specs=pl.BlockSpec((tile_r, f_pad), lambda i: (i, 0)),
        compiler_params=pltpu.CompilerParams(
            # TODO(synk): verify with xprof that both v7x TensorCores engage;
            # if not, promote this axis to CORE_PARALLEL.
            dimension_semantics=("parallel",),
            vmem_limit_bytes=vmem_limit,
        ),
    )(x2, out2, a2, b2)

    if f_pad != F:
        y = y[:, :F]
    return y.reshape(B, S, F)


if __name__ == "__main__":
    key = jax.random.PRNGKey(0)
    kx, ko = jax.random.split(key)

    B, S, F = 2, 8, 32          # batch, seq, hidden (size == F)
    x = jax.random.normal(kx, (B, S, F), dtype=jnp.float32)
    out = jax.random.normal(ko, (B, S, F), dtype=jnp.float32)

    # nn.Parameter(torch.ones(F)) / torch.zeros(F) — deterministic init.
    a_2 = jnp.ones((F,), dtype=jnp.float32)
    b_2 = jnp.zeros((F,), dtype=jnp.float32)

    y = res_connect(x, out, a_2, b_2)
    jax.block_until_ready(y)

    # Reference check in plain JAX (torch-style unbiased std, eps on std).
    mean = jnp.mean(out, axis=-1, keepdims=True)
    std = jnp.sqrt(jnp.sum((out - mean) ** 2, axis=-1, keepdims=True) / (F - 1))
    ref = x + a_2 * (out - mean) / (std + EPS) + b_2
    assert jnp.allclose(y, ref, atol=1e-5, rtol=1e-5), "mismatch vs reference"

    print("KERNEL_OK")
</pallas_src>

<mosaic_0001>
module attributes {stable_mosaic.version = 11 : i64} {
  func.func @kernel(%arg0: i32, %arg1: memref<16x128xf32, #tpu.memory_space<vmem>>, %arg2: memref<16x128xf32, #tpu.memory_space<vmem>>, %arg3: memref<1x128xf32, #tpu.memory_space<vmem>>, %arg4: memref<1x128xf32, #tpu.memory_space<vmem>>, %arg5: memref<16x128xf32, #tpu.memory_space<vmem>>) attributes {dimension_semantics = [#tpu.dimension_semantics<parallel>], iteration_bounds = array<i64: 1>, scalar_prefetch = 0 : i64, scratch_operands = 0 : i64, tpu.core_type = #tpu.core_type<tc>, window_params = [{transform_indices = @transform_0, window_bounds = array<i64: 16, 128>}, {transform_indices = @transform_1, window_bounds = array<i64: 16, 128>}, {pipeline_mode = #tpu.pipeline_mode<synchronous>, transform_indices = @transform_2, window_bounds = array<i64: 1, 128>}, {pipeline_mode = #tpu.pipeline_mode<synchronous>, transform_indices = @transform_3, window_bounds = array<i64: 1, 128>}, {transform_indices = @transform_4, window_bounds = array<i64: 16, 128>}]} {
    %c0 = arith.constant 0 : index
    %c0_0 = arith.constant 0 : index
    %0 = vector.load %arg2[%c0, %c0_0] : memref<16x128xf32, #tpu.memory_space<vmem>>, vector<16x128xf32>
    %c0_1 = arith.constant 0 : index
    %c0_2 = arith.constant 0 : index
    %1 = vector.load %arg3[%c0_1, %c0_2] : memref<1x128xf32, #tpu.memory_space<vmem>>, vector<1x128xf32>
    %c0_3 = arith.constant 0 : index
    %c0_4 = arith.constant 0 : index
    %2 = vector.load %arg4[%c0_3, %c0_4] : memref<1x128xf32, #tpu.memory_space<vmem>>, vector<1x128xf32>
    %cst = arith.constant dense<0.000000e+00> : vector<16xf32>
    %3 = vector.multi_reduction <add>, %0, %cst [1] : vector<16x128xf32> to vector<16xf32>
    %4 = vector.shape_cast %3 : vector<16xf32> to vector<16x1xf32>
    %cst_5 = arith.constant 3.125000e-02 : f32
    %5 = vector.broadcast %cst_5 : f32 to vector<16x1xf32>
    %6 = arith.mulf %4, %5 : vector<16x1xf32>
    %7 = vector.broadcast %6 : vector<16x1xf32> to vector<16x128xf32>
    %8 = arith.subf %0, %7 : vector<16x128xf32>
    %9 = tpu.iota {dimensions = array<i32: 1>} : vector<1x128xi32>
    %c32_i32 = arith.constant 32 : i32
    %10 = vector.broadcast %c32_i32 : i32 to vector<1x128xi32>
    %11 = arith.cmpi slt, %9, %10 : vector<1x128xi32>
    %cst_6 = arith.constant 0.000000e+00 : f32
    %12 = vector.shape_cast %11 : vector<1x128xi1> to vector<1x128xi1>
    %13 = vector.broadcast %12 : vector<1x128xi1> to vector<16x128xi1>
    %14 = vector.broadcast %cst_6 : f32 to vector<16x128xf32>
    %15 = arith.select %13, %8, %14 : vector<16x128xi1>, vector<16x128xf32>
    %16 = arith.mulf %15, %15 : vector<16x128xf32>
    %cst_7 = arith.constant dense<0.000000e+00> : vector<16xf32>
    %17 = vector.multi_reduction <add>, %16, %cst_7 [1] : vector<16x128xf32> to vector<16xf32>
    %18 = vector.shape_cast %17 : vector<16xf32> to vector<16x1xf32>
    %cst_8 = arith.constant 0.0322580636 : f32
    %19 = vector.broadcast %cst_8 : f32 to vector<16x1xf32>
    %20 = arith.mulf %18, %19 : vector<16x1xf32>
    %21 = math.sqrt %20 : vector<16x1xf32>
    %cst_9 = arith.constant 9.99999997E-7 : f32
    %22 = vector.broadcast %cst_9 : f32 to vector<16x1xf32>
    %23 = arith.addf %21, %22 : vector<16x1xf32>
    %24 = tpu.reciprocal %23 : vector<16x1xf32> -> vector<16x1xf32>
    %25 = vector.broadcast %1 : vector<1x128xf32> to vector<16x128xf32>
    %26 = arith.mulf %25, %15 : vector<16x128xf32>
    %27 = vector.broadcast %24 : vector<16x1xf32> to vector<16x128xf32>
    %28 = arith.mulf %26, %27 : vector<16x128xf32>
    %29 = vector.broadcast %2 : vector<1x128xf32> to vector<16x128xf32>
    %30 = arith.addf %28, %29 : vector<16x128xf32>
    %c0_10 = arith.constant 0 : index
    %c0_11 = arith.constant 0 : index
    %31 = vector.load %arg1[%c0_10, %c0_11] : memref<16x128xf32, #tpu.memory_space<vmem>>, vector<16x128xf32>
    %32 = arith.addf %31, %30 : vector<16x128xf32>
    %c0_12 = arith.constant 0 : index
    %c0_13 = arith.constant 0 : index
    %33 = vector.load %arg5[%c0_12, %c0_13] : memref<16x128xf32, #tpu.memory_space<vmem>>, vector<16x128xf32>
    tpu.vector_store %arg5[%c0_12, %c0_13], %32 {strides = array<i32>} : memref<16x128xf32, #tpu.memory_space<vmem>>, vector<16x128xf32>,
    return
  }
  func.func @transform_0(%arg0: i32) -> (i32, i32) {
    %c0_i32 = arith.constant 0 : i32
    %c0_i32_0 = arith.constant 0 : i32
    return %arg0, %c0_i32 : i32, i32
  }
  func.func @transform_1(%arg0: i32) -> (i32, i32) {
    %c0_i32 = arith.constant 0 : i32
    %c0_i32_0 = arith.constant 0 : i32
    return %arg0, %c0_i32 : i32, i32
  }
  func.func @transform_2(%arg0: i32) -> (i32, i32) {
    %c0_i32 = arith.constant 0 : i32
    %c0_i32_0 = arith.constant 0 : i32
    %c0_i32_1 = arith.constant 0 : i32
    return %c0_i32, %c0_i32_0 : i32, i32
  }
  func.func @transform_3(%arg0: i32) -> (i32, i32) {
    %c0_i32 = arith.constant 0 : i32
    %c0_i32_0 = arith.constant 0 : i32
    %c0_i32_1 = arith.constant 0 : i32
    return %c0_i32, %c0_i32_0 : i32, i32
  }
  func.func @transform_4(%arg0: i32) -> (i32, i32) {
    %c0_i32 = arith.constant 0 : i32
    %c0_i32_0 = arith.constant 0 : i32
    return %arg0, %c0_i32 : i32, i32
  }
}

</mosaic_0001>

<llo_original>
// kernel: tpu_custom_call.1
$region0: #{tpu_custom_call.1}
  #allocation0 [shape = 'u32[]', space=smem, size = 0x4, offset = 0x4, fixed_abs, tag = 'smem constant byte address 0x4 - core index']
  #allocation1 [shape = 'u32[144,128]{1,0:T(1,128)}', space=vmem, size = 0x12000, scoped, tag = 'internal scratch']
  %s0 = inlined_call_operand.hbm [shape: f32[16,128], index: 0, kind: input, shape index: {}]
  %s1 = inlined_call_operand.hbm [shape: f32[16,128], index: 1, kind: input, shape index: {}]
  %s2 = inlined_call_operand.vmem [shape: f32[1,128], index: 2, kind: input, shape index: {}]
  %s3 = inlined_call_operand.vmem [shape: f32[1,128], index: 3, kind: input, shape index: {}]
  %s4 = inlined_call_operand.hbm [shape: f32[16,128], index: 4, kind: output, shape index: {}]
  %s5 = sld [smem:[#allocation0]]
  $region34: #{tpu_custom_call.1} parent=0
    _
  %s7 = ssub.s32 1, %s5
  %s8 = scalar_select 0, %s7, %s5
  $region1: #{tpu_custom_call.1} parent=0
    #allocation2 [shape = 'u8[8192]{0}', space=vmem, size = 0x2000, scoped, tag = 'input window, operand 0, single buffered']
    #allocation3 [shape = 's32[1]{0}', space=sflag, size = 0x4, scoped, tag = 'scoped memory for tpu_custom_call.1']
    #allocation4 [shape = 's32[1]{0}', space=sflag, size = 0x4, scoped, tag = 'scoped memory for tpu_custom_call.1']
    #allocation5 [shape = 'u8[8192]{0}', space=vmem, size = 0x2000, scoped, tag = 'input window, operand 1, single buffered']
    #allocation6 [shape = 's32[1]{0}', space=sflag, size = 0x4, scoped, tag = 'scoped memory for tpu_custom_call.1']
    #allocation7 [shape = 'u8[8192]{0}', space=vmem, size = 0x2000, scoped, tag = 'output window, operand 0, single buffered']
    %9 = vsyncpa [#allocation3], 0
    %10 = vsyncpa [#allocation6], 0
    %11 = vsyncpa [#allocation4], 0
    // Predicated region
    $region2: #{tpu_custom_call.1} parent=1 // pred_check
      _
    $region3: #{tpu_custom_call.1} parent=1 // pred_check_branch
      %13 = sbr.rel (0) target = $region5
    $region4: #{tpu_custom_call.1} parent=1 // pred_region
      %s15 = ssub.s32 256, 256
      %16 = vsyncadd [#allocation3], %s15
      %s17 = sshll.u32 [#allocation2], 4
      %s18 = int_to_ptr.vmem [resolvable:$true] %s17
      %23 = dma.hbm_to_vmem [thread:$0]  %s0, 256, %s18, [#allocation3], 128, 128, 8
    $region5: #{tpu_custom_call.1} parent=1 // pred_fallthru
      _
    // Predicated region
    $region6: #{tpu_custom_call.1} parent=1 // pred_check
      _
    $region7: #{tpu_custom_call.1} parent=1 // pred_check_branch
      %25 = sbr.rel (0) target = $region9
    $region8: #{tpu_custom_call.1} parent=1 // pred_region
      %s27 = ssub.s32 256, 256
      %28 = vsyncadd [#allocation6], %s27
      %s29 = sshll.u32 [#allocation5], 4
      %s30 = int_to_ptr.vmem [resolvable:$true] %s29
      %35 = dma.hbm_to_vmem [thread:$0]  %s1, 256, %s30, [#allocation6], 128, 128, 8
    $region9: #{tpu_custom_call.1} parent=1 // pred_fallthru
      _
    // Predicated region
    $region10: #{tpu_custom_call.1} parent=1 // pred_check
      _
    $region11: #{tpu_custom_call.1} parent=1 // pred_check_branch
      %37 = sbr.rel (0) target = $region13
    $region12: #{tpu_custom_call.1} parent=1 // pred_region
      _
    $region13: #{tpu_custom_call.1} parent=1 // pred_fallthru
      _
    // Predicated region
    $region14: #{tpu_custom_call.1} parent=1 // pred_check
      _
    $region15: #{tpu_custom_call.1} parent=1 // pred_check_branch
      %39 = sbr.rel (0) target = $region17
    $region16: #{tpu_custom_call.1} parent=1 // pred_region
      _
    $region17: #{tpu_custom_call.1} parent=1 // pred_fallthru
      _
    // Predicated region
    $region18: #{tpu_custom_call.1} parent=1 // pred_check
      _
    $region19: #{tpu_custom_call.1} parent=1 // pred_check_branch
      %41 = sbr.rel (0) target = $region21
    $region20: #{tpu_custom_call.1} parent=1 // pred_region
      %42 = dma.done [#allocation3], 256
    $region21: #{tpu_custom_call.1} parent=1 // pred_fallthru
      _
    // Predicated region
    $region22: #{tpu_custom_call.1} parent=1 // pred_check
      _
    $region23: #{tpu_custom_call.1} parent=1 // pred_check_branch
      %44 = sbr.rel (0) target = $region25
    $region24: #{tpu_custom_call.1} parent=1 // pred_region
      %45 = dma.done [#allocation6], 256
    $region25: #{tpu_custom_call.1} parent=1 // pred_fallthru
      _
    %v46 = vld [vmem:[#allocation5] sm:$0xff]
    %v47 = vld [vmem:[#allocation5 + $0x8] sm:$0xff]
    %v48 = vld [vmem:[%s2] sm:$0x1]
    %v49 = vld [vmem:[%s3] sm:$0x1]
    %50 = vadd.xlane.f32.xlu0 %v46
    %v51 = vpop.xlane.xlu0 %50
    %52 = vadd.xlane.f32.xlu0 %v47
    %v53 = vpop.xlane.xlu0 %52
    %v54 = vmul.f32 %v51, 0.03125
    %v55 = vmul.f32 %v53, 0.03125
    %v56 = vsub.f32 %v46, %v54
    %v57 = vsub.f32 %v47, %v55
    %v58 = vlaneseq
    %v59 = vand.u32 %v58, 127
    %vm60 = vcmp.lt.s32.totalorder %v59, 32
    %v61 = vsel %vm60, 1, 0
    %vm62 = vcmp.eq.s32.totalorder %v61, 1
    %v63 = vsel %vm62, %v56, 0.0
    %v64 = vsel %vm62, %v57, 0.0
    %v65 = vmul.f32 %v63, %v63
    %v66 = vmul.f32 %v64, %v64
    %67 = vadd.xlane.f32.xlu0 %v65
    %v68 = vpop.xlane.xlu0 %67
    %69 = vadd.xlane.f32.xlu0 %v66
    %v70 = vpop.xlane.xlu0 %69
    %v71 = vmul.f32 %v68, 0.032258064
    %v72 = vmul.f32 %v70, 0.032258064
    %v73 = vrsqrt.pop %v71
    %v74 = vmul.f32 %v71, %v73
    %vm75 = vcmp.eq.f32.partialorder %v71, inf
    %v76 = vsel %vm75, %v71, %v74
    %vm77 = vcmp.eq.f32.partialorder %v71, 0.0
    %v78 = vand.u32 %v71, 2147483648
    %v79 = vsel %vm77, %v78, %v76
    %v80 = vrsqrt.pop %v72
    %v81 = vmul.f32 %v72, %v80
    %vm82 = vcmp.eq.f32.partialorder %v72, inf
    %v83 = vsel %vm82, %v72, %v81
    %vm84 = vcmp.eq.f32.partialorder %v72, 0.0
    %v85 = vand.u32 %v72, 2147483648
    %v86 = vsel %vm84, %v85, %v83
    %v87 = vadd.f32 %v79, 1e-06
    %v88 = vadd.f32 %v86, 1e-06
    %v89 = vrcp.pop %v87
    %v90 = vrcp.pop %v88
    %v92 = vlaneseq
    %v93 = vshrl.u32 %v92, 7
    %v94 = vsub.s32 0, %v93
    %v95 = vrot.slane %v48, %v94
    %v97 = vmul.f32 %v95, %v63
    %v98 = vmul.f32 %v95, %v64
    %v99 = vmul.f32 %v97, %v89
    %v100 = vmul.f32 %v98, %v90
    %v102 = vlaneseq
    %v103 = vshrl.u32 %v102, 7
    %v104 = vsub.s32 0, %v103
    %v105 = vrot.slane %v49, %v104
    %v107 = vadd.f32 %v99, %v105
    %v108 = vadd.f32 %v100, %v105
    %v109 = vld [vmem:[#allocation2] sm:$0xff]
    %v110 = vld [vmem:[#allocation2 + $0x8] sm:$0xff]
    %v111 = vadd.f32 %v109, %v107
    %v112 = vadd.f32 %v110, %v108
    %113 = vst [vmem:[#allocation7] sm:$0xff] %v111
    %114 = vst [vmem:[#allocation7 + $0x8] sm:$0xff] %v112
    // Predicated region
    $region26: #{tpu_custom_call.1} parent=1 // pred_check
      _
    $region27: #{tpu_custom_call.1} parent=1 // pred_check_branch
      %116 = sbr.rel (0) target = $region29
    $region28: #{tpu_custom_call.1} parent=1 // pred_region
      %s118 = ssub.s32 256, 256
      %119 = vsyncadd [#allocation4], %s118
      %s120 = sshll.u32 [#allocation7], 4
      %s121 = int_to_ptr.vmem [resolvable:$true] %s120
      %126 = dma.vmem_to_hbm [thread:$0]  %s121, 256, %s4, [#allocation4], 128, 128, 8
    $region29: #{tpu_custom_call.1} parent=1 // pred_fallthru
      _
    // Predicated region
    $region30: #{tpu_custom_call.1} parent=1 // pred_check
      _
    $region31: #{tpu_custom_call.1} parent=1 // pred_check_branch
      %128 = sbr.rel (0) target = $region33
    $region32: #{tpu_custom_call.1} parent=1 // pred_region
      %129 = dma.done [#allocation4], 256
    $region33: #{tpu_custom_call.1} parent=1 // pred_fallthru
      _
    %130 = vsyncpa [#allocation3], 1
    %131 = vsyncpa [#allocation6], 1
    %132 = vsyncpa [#allocation4], 1

</llo_original>
